<compile_context>
chip_gen: v7x
topology: tpu7x:2x2x1
jax: 0.10.0
libtpu: 0.0.40
codegen_flags: <defaults>
</compile_context>

<pallas_src>
import functools

import jax
import jax.numpy as jnp
from jax.experimental import pallas as pl
from jax.experimental.pallas import tpu as pltpu


# ----------------------------- helpers --------------------------------------

_K_TILING_THRESHOLD = 512          # inputDim above this -> pad/tile K
_VMEM_BUDGET_BYTES = 24 * 1024 * 1024   # headroom under 32 MiB scoped limit


def _round_up(x, m):
    return ((x + m - 1) // m) * m


def _pick_divisor_tile(dim_pad, candidates):
    """Largest candidate tile that divides dim_pad (candidates descend)."""
    for c in candidates:
        if c <= dim_pad and dim_pad % c == 0:
            return c
    return dim_pad


def _plan_tm(m_pad, tk, tn):
    """Choose the M tile: as large as the VMEM budget allows (<=2048 rows),
    multiple of 8; split big single-tile cases so both v7x cores get work."""
    w_bytes = tk * tn * 4 * 2            # W^T tile, double-buffered
    bias_bytes = tn * 4 * 2
    per_row = (tk + tn) * 4 * 2          # x tile + out tile rows, double-buffered
    cap = (_VMEM_BUDGET_BYTES - w_bytes - bias_bytes) // max(per_row, 1)
    cap = max(8, min(2048, (cap // 8) * 8))
    if m_pad <= cap:
        if m_pad >= 1024:
            # Give both TensorCores (v7x megacore) an M tile each.
            return _round_up(pl.cdiv(m_pad, 2), 8)
        return m_pad
    return cap


# ----------------------------- kernels ---------------------------------------

def _linear_small_kernel(x_ref, w_ref, b_ref, o_ref):
    """Full-K block: one MXU pass + bias, no K grid axis, no scratch."""
    o_ref[...] = (
        jnp.dot(x_ref[...], w_ref[...], preferred_element_type=jnp.float32)
        + b_ref[...]
    ).astype(o_ref.dtype)


def _linear_tiled_kernel(x_ref, w_ref, b_ref, o_ref):
    """K-tiled path: accumulate directly into the resident f32 output block."""
    k = pl.program_id(2)
    part = jnp.dot(x_ref[...], w_ref[...], preferred_element_type=jnp.float32)

    @pl.when(k == 0)
    def _():
        o_ref[...] = part

    @pl.when(k > 0)
    def _():
        o_ref[...] = o_ref[...] + part

    @pl.when(k == pl.num_programs(2) - 1)
    def _():
        o_ref[...] = o_ref[...] + b_ref[...]   # bias folded into epilogue


# ----------------------------- wrapper ---------------------------------------

@functools.partial(jax.jit, static_argnames=("out_dim",))
def linear_forward(x, wt_padded, bias_padded, out_dim):
    """x: [B, Din] f32.
       wt_padded: [Kw, N_pad] f32  (W^T, built once at init; Kw is Din, or Din
                                    rounded up to 128 when Din > 512).
       bias_padded: [1, N_pad] f32 (zero-padded).
       Returns [B, out_dim] f32."""
    batch, in_dim = x.shape
    kw, n_pad = wt_padded.shape

    # ---- N tile (always lane-dense multiple of 128) ----
    tn = _pick_divisor_tile(n_pad, (512, 256, 128))

    # ---- M padding: only to a sublane multiple of 8 (<=7 wasted rows) ----
    m_pad = _round_up(max(batch, 1), 8)

    use_k_tiling = in_dim > _K_TILING_THRESHOLD

    if not use_k_tiling:
        # No K padding at all: blocks carry the full K extent.
        tk = in_dim
        tm = _plan_tm(m_pad, tk, tn)
        x_p = x if m_pad == batch else jnp.pad(x, ((0, m_pad - batch), (0, 0)))

        grid = (pl.cdiv(m_pad, tm), n_pad // tn)
        out = pl.pallas_call(
            _linear_small_kernel,
            out_shape=jax.ShapeDtypeStruct((m_pad, n_pad), jnp.float32),
            grid_spec=pltpu.PrefetchScalarGridSpec(
                num_scalar_prefetch=0,
                grid=grid,
                in_specs=[
                    pl.BlockSpec((tm, in_dim), lambda i, j: (i, 0)),   # x
                    pl.BlockSpec((in_dim, tn), lambda i, j: (0, j)),   # W^T
                    pl.BlockSpec((1, tn), lambda i, j: (0, j)),        # bias
                ],
                out_specs=pl.BlockSpec((tm, tn), lambda i, j: (i, j)),
            ),
            compiler_params=pltpu.CompilerParams(
                dimension_semantics=("parallel", "parallel"),
                vmem_limit_bytes=32 * 1024 * 1024,
            ),
        )(x_p, wt_padded, bias_padded)
    else:
        # Large contraction: pad K to a multiple of 128 and tile it.
        k_pad = kw                                   # already padded at init
        tk = _pick_divisor_tile(k_pad, (512, 256, 128))
        tm = _plan_tm(m_pad, tk, tn)

        x_p = x
        if m_pad != batch or k_pad != in_dim:
            x_p = jnp.pad(x, ((0, m_pad - batch), (0, k_pad - in_dim)))

        grid = (pl.cdiv(m_pad, tm), n_pad // tn, k_pad // tk)
        out = pl.pallas_call(
            _linear_tiled_kernel,
            out_shape=jax.ShapeDtypeStruct((m_pad, n_pad), jnp.float32),
            grid_spec=pltpu.PrefetchScalarGridSpec(
                num_scalar_prefetch=0,
                grid=grid,
                in_specs=[
                    pl.BlockSpec((tm, tk), lambda i, j, k: (i, k)),    # x
                    pl.BlockSpec((tk, tn), lambda i, j, k: (k, j)),    # W^T
                    pl.BlockSpec((1, tn), lambda i, j, k: (0, j)),     # bias
                ],
                out_specs=pl.BlockSpec((tm, tn), lambda i, j, k: (i, j)),
            ),
            compiler_params=pltpu.CompilerParams(
                dimension_semantics=("parallel", "parallel", "arbitrary"),
                vmem_limit_bytes=32 * 1024 * 1024,
            ),
        )(x_p, wt_padded, bias_padded)

    return out[:batch, :out_dim]


# ----------------------------- module mirror --------------------------------

class LinearRegressionPallas:
    """Mirror of the PyTorch LinearRegression module's forward pass."""

    def __init__(self, inputDim=1, outputDim=1, key=jax.random.PRNGKey(0)):
        self.inputDim = inputDim
        self.outputDim = outputDim

        # nn.Linear-style uniform(-1/sqrt(in), 1/sqrt(in)) init.
        kw, kb = jax.random.split(key)
        bound = 1.0 / (inputDim ** 0.5)
        self.weight = jax.random.uniform(
            kw, (outputDim, inputDim), jnp.float32, -bound, bound)
        self.bias = jax.random.uniform(
            kb, (outputDim,), jnp.float32, -bound, bound)

        # Pre-transpose (+pad) W and bias ONCE.  N is always lane-padded to a
        # multiple of 128; K is only padded when inputDim > threshold (then it
        # is tiled in the kernel).
        n_pad = _round_up(max(outputDim, 1), 128)
        if inputDim > _K_TILING_THRESHOLD:
            k_dim = _round_up(inputDim, 128)
        else:
            k_dim = inputDim
        wt = jnp.zeros((k_dim, n_pad), jnp.float32)
        wt = wt.at[:inputDim, :outputDim].set(self.weight.T)
        b = jnp.zeros((1, n_pad), jnp.float32)
        b = b.at[0, :outputDim].set(self.bias)
        self.wt_padded = wt
        self.bias_padded = b

    def forward(self, x):
        x = jnp.asarray(x, jnp.float32).reshape(-1, self.inputDim)
        return linear_forward(x, self.wt_padded, self.bias_padded,
                              self.outputDim)

    # TODO(synk): fit()/SGD training loop not implemented (forward pass only).


# ----------------------------- demo / check ---------------------------------

if __name__ == "__main__":
    key = jax.random.PRNGKey(0)
    k_model, k_x, k_model2, k_x2 = jax.random.split(key, 4)

    # Small-dim path (the actual LinearRegression regime): no K padding/tiling.
    batch, input_dim, output_dim = 8, 4, 3
    model = LinearRegressionPallas(inputDim=input_dim, outputDim=output_dim,
                                   key=k_model)
    x = jax.random.normal(k_x, (batch, input_dim), jnp.float32)
    out = jax.block_until_ready(model.forward(x))
    ref = x @ model.weight.T + model.bias
    assert out.shape == (batch, output_dim)
    assert jnp.allclose(out, ref, atol=1e-5, rtol=1e-5)

    # Large-K path (exercises the K-tiled kernel with o_ref accumulation).
    batch2, in2, out2 = 16, 640, 256
    model2 = LinearRegressionPallas(inputDim=in2, outputDim=out2, key=k_model2)
    x2 = jax.random.normal(k_x2, (batch2, in2), jnp.float32)
    y2 = jax.block_until_ready(model2.forward(x2))
    ref2 = x2 @ model2.weight.T + model2.bias
    assert y2.shape == (batch2, out2)
    assert jnp.allclose(y2, ref2, atol=1e-4, rtol=1e-4)

    print("KERNEL_OK")
</pallas_src>

<mosaic_0001>
module attributes {stable_mosaic.version = 11 : i64} {
  func.func @_linear_small_kernel(%arg0: i32, %arg1: i32, %arg2: memref<8x4xf32, #tpu.memory_space<vmem>>, %arg3: memref<4x128xf32, #tpu.memory_space<vmem>>, %arg4: memref<1x128xf32, #tpu.memory_space<vmem>>, %arg5: memref<8x128xf32, #tpu.memory_space<vmem>>) attributes {dimension_semantics = [#tpu.dimension_semantics<parallel>, #tpu.dimension_semantics<parallel>], iteration_bounds = array<i64: 1, 1>, scalar_prefetch = 0 : i64, scratch_operands = 0 : i64, tpu.core_type = #tpu.core_type<tc>, window_params = [{transform_indices = @transform_0, window_bounds = array<i64: 8, 4>}, {transform_indices = @transform_1, window_bounds = array<i64: 4, 128>}, {transform_indices = @transform_2, window_bounds = array<i64: 1, 128>}, {transform_indices = @transform_3, window_bounds = array<i64: 8, 128>}]} {
    %c0 = arith.constant 0 : index
    %c0_0 = arith.constant 0 : index
    %0 = vector.load %arg2[%c0, %c0_0] : memref<8x4xf32, #tpu.memory_space<vmem>>, vector<8x4xf32>
    %c0_1 = arith.constant 0 : index
    %c0_2 = arith.constant 0 : index
    %1 = vector.load %arg3[%c0_1, %c0_2] : memref<4x128xf32, #tpu.memory_space<vmem>>, vector<4x128xf32>
    %cst = arith.constant dense<0.000000e+00> : vector<8x128xf32>
    %2 = tpu.matmul %0, %1, %cst {dimension_numbers = #tpu.dot_dimension_numbers<[1], [0], [0], [1], [0, 0, 1, 1], [], []>} : vector<8x4xf32>, vector<4x128xf32>, vector<8x128xf32> -> vector<8x128xf32>
    %c0_3 = arith.constant 0 : index
    %c0_4 = arith.constant 0 : index
    %3 = vector.load %arg4[%c0_3, %c0_4] : memref<1x128xf32, #tpu.memory_space<vmem>>, vector<1x128xf32>
    %4 = vector.broadcast %3 : vector<1x128xf32> to vector<8x128xf32>
    %5 = arith.addf %2, %4 : vector<8x128xf32>
    %c0_5 = arith.constant 0 : index
    %c0_6 = arith.constant 0 : index
    %6 = vector.load %arg5[%c0_5, %c0_6] : memref<8x128xf32, #tpu.memory_space<vmem>>, vector<8x128xf32>
    tpu.vector_store %arg5[%c0_5, %c0_6], %5 {strides = array<i32>} : memref<8x128xf32, #tpu.memory_space<vmem>>, vector<8x128xf32>,
    return
  }
  func.func @transform_0(%arg0: i32, %arg1: i32) -> (i32, i32) {
    %c0_i32 = arith.constant 0 : i32
    %c0_i32_0 = arith.constant 0 : i32
    return %arg0, %c0_i32 : i32, i32
  }
  func.func @transform_1(%arg0: i32, %arg1: i32) -> (i32, i32) {
    %c0_i32 = arith.constant 0 : i32
    %c0_i32_0 = arith.constant 0 : i32
    return %c0_i32, %arg1 : i32, i32
  }
  func.func @transform_2(%arg0: i32, %arg1: i32) -> (i32, i32) {
    %c0_i32 = arith.constant 0 : i32
    %c0_i32_0 = arith.constant 0 : i32
    return %c0_i32, %arg1 : i32, i32
  }
  func.func @transform_3(%arg0: i32, %arg1: i32) -> (i32, i32) {
    %c0_i32 = arith.constant 0 : i32
    return %arg0, %arg1 : i32, i32
  }
}

</mosaic_0001>

<llo_original>
// kernel: linear_forward.1
$region0: #{linear_forward.1}
  #allocation0 [shape = 'u32[]', space=smem, size = 0x4, offset = 0x4, fixed_abs, tag = 'smem constant byte address 0x4 - core index']
  #allocation1 [shape = 'u32[144,128]{1,0:T(1,128)}', space=vmem, size = 0x12000, scoped, tag = 'internal scratch']
  %s0 = inlined_call_operand.vmem [shape: f32[8,4], index: 0, kind: input, shape index: {}]
  %s1 = inlined_call_operand.vmem [shape: f32[4,128], index: 1, kind: input, shape index: {}]
  %s2 = inlined_call_operand.vmem [shape: f32[1,128], index: 2, kind: input, shape index: {}]
  %s3 = inlined_call_operand.vmem [shape: f32[8,128], index: 3, kind: output, shape index: {}]
  %s4 = sld [smem:[#allocation0]]
  $region22: #{linear_forward.1} parent=0
    _
  %s6 = ssub.s32 1, %s4
  %s7 = scalar_select 0, %s6, %s4
  // Predicated region
  $region2: #{linear_forward.1} parent=0 // pred_check
    _
  $region3: #{linear_forward.1} parent=0 // pred_check_branch
    %9 = sbr.rel (0) target = $region5
  $region4: #{linear_forward.1} parent=0 // pred_region
    _
  $region5: #{linear_forward.1} parent=0 // pred_fallthru
    _
  // Predicated region
  $region6: #{linear_forward.1} parent=0 // pred_check
    _
  $region7: #{linear_forward.1} parent=0 // pred_check_branch
    %11 = sbr.rel (0) target = $region9
  $region8: #{linear_forward.1} parent=0 // pred_region
    _
  $region9: #{linear_forward.1} parent=0 // pred_fallthru
    _
  // Predicated region
  $region10: #{linear_forward.1} parent=0 // pred_check
    _
  $region11: #{linear_forward.1} parent=0 // pred_check_branch
    %13 = sbr.rel (0) target = $region13
  $region12: #{linear_forward.1} parent=0 // pred_region
    _
  $region13: #{linear_forward.1} parent=0 // pred_fallthru
    _
  %v14 = vld [vmem:[%s0] sm:$0xff]
  %v15 = vld [vmem:[%s1] sm:$0xf]
  %v16 = vld [vmem:[%s2] sm:$0x1]
  %v18 = vlaneseq
  %v19 = vshrl.u32 %v18, 7
  %v20 = vsub.s32 0, %v19
  %v21 = vrot.slane %v16, %v20
  %vm23 = vcmask 31744
  %v25 = vsel %vm23, %v14, 0
  %vm27 = vcmask 1043456
  %v29 = vsel %vm27, %v15, 0
  %31 = vmatprep.subr.mxu0 0.0
  %32 = vmatpush1.msra.mxu0 %v29
  %33 = vmatprep.subr.mxu0 0.0
  %34 = vmatpush1.msra.mxu0 0.0
  %35 = vmatprep.subr.mxu0 0.0
  %36 = vmatpush1.msra.mxu0 0.0
  %37 = vmatprep.subr.mxu0 0.0
  %38 = vmatpush1.msra.mxu0 0.0
  %39 = vmatprep.subr.mxu0 0.0
  %40 = vmatpush1.msra.mxu0 0.0
  %41 = vmatprep.subr.mxu0 0.0
  %42 = vmatpush1.msra.mxu0 0.0
  %43 = vmatprep.subr.mxu0 0.0
  %44 = vmatpush1.msra.mxu0 0.0
  %45 = vmatprep.subr.mxu0 0.0
  %46 = vmatpush1.msra.mxu0 0.0
  %47 = vmatprep.subr.mxu0 0.0
  %48 = vmatpush1.msra.mxu0 0.0
  %49 = vmatprep.subr.mxu0 0.0
  %50 = vmatpush1.msra.mxu0 0.0
  %51 = vmatprep.subr.mxu0 0.0
  %52 = vmatpush1.msra.mxu0 0.0
  %53 = vmatprep.subr.mxu0 0.0
  %54 = vmatpush1.msra.mxu0 0.0
  %55 = vmatprep.subr.mxu0 0.0
  %56 = vmatpush1.msra.mxu0 0.0
  %57 = vmatprep.subr.mxu0 0.0
  %58 = vmatpush1.msra.mxu0 0.0
  %59 = vmatprep.subr.mxu0 0.0
  %60 = vmatpush1.msra.mxu0 0.0
  %61 = vmatprep.subr.mxu0 0.0
  %62 = vmatpush1.msra.mxu0 0.0
  %63 = vmatprep.subr.mxu0 0.0
  %64 = vmatpush1.msra.mxu0 0.0
  %65 = vmatprep.subr.mxu0 0.0
  %66 = vmatpush1.msra.mxu0 0.0
  %67 = vmatprep.subr.mxu0 0.0
  %68 = vmatpush1.msra.mxu0 0.0
  %69 = vmatprep.subr.mxu0 0.0
  %70 = vmatpush1.msra.mxu0 0.0
  %71 = vmatprep.subr.mxu0 0.0
  %72 = vmatpush1.msra.mxu0 0.0
  %73 = vmatprep.subr.mxu0 0.0
  %74 = vmatpush1.msra.mxu0 0.0
  %75 = vmatprep.subr.mxu0 0.0
  %76 = vmatpush1.msra.mxu0 0.0
  %77 = vmatprep.subr.mxu0 0.0
  %78 = vmatpush1.msra.mxu0 0.0
  %79 = vmatprep.subr.mxu0 0.0
  %80 = vmatpush1.msra.mxu0 0.0
  %81 = vmatprep.subr.mxu0 0.0
  %82 = vmatpush1.msra.mxu0 0.0
  %83 = vmatprep.subr.mxu0 0.0
  %84 = vmatpush1.msra.mxu0 0.0
  %85 = vmatprep.subr.mxu0 0.0
  %86 = vmatpush1.msra.mxu0 0.0
  %87 = vmatprep.subr.mxu0 0.0
  %88 = vmatpush1.msra.mxu0 0.0
  %89 = vmatprep.subr.mxu0 0.0
  %90 = vmatpush1.msra.mxu0 0.0
  %91 = vmatprep.subr.mxu0 0.0
  %92 = vmatpush1.msra.mxu0 0.0
  %93 = vmatprep.subr.mxu0 0.0
  %94 = vmatpush1.msra.mxu0 0.0
  %95 = vmatprep.mubr.f32.mxu0 0.0
  %96 = vmatmul.mubr.f32.gmra.mrb[0].mxu0 %v25
  %v97 = vpop.f32.mrb[0].mxu0
  %v98 = vadd.f32 %v21, %v97
  %v99 = vpop.f32.mrb[0].mxu0
  %100 = vdwg.mxu0
  %101 = vst [vmem:[%s3] sm:$0xff] %v98
  // Predicated region
  $region14: #{linear_forward.1} parent=0 // pred_check
    _
  $region15: #{linear_forward.1} parent=0 // pred_check_branch
    %103 = sbr.rel (0) target = $region17
  $region16: #{linear_forward.1} parent=0 // pred_region
    _
  $region17: #{linear_forward.1} parent=0 // pred_fallthru
    _
  // Predicated region
  $region18: #{linear_forward.1} parent=0 // pred_check
    _
  $region19: #{linear_forward.1} parent=0 // pred_check_branch
    %105 = sbr.rel (0) target = $region21
  $region20: #{linear_forward.1} parent=0 // pred_region
    _
  $region21: #{linear_forward.1} parent=0 // pred_fallthru
    _

</llo_original>
